<compile_context>
chip_gen: v5e
topology: v5e:2x2
jax: 0.10.0
libtpu: 0.0.40
codegen_flags: <defaults>
</compile_context>

<pallas_src>
import jax
import jax.numpy as jnp
from jax.experimental import pallas as pl
from jax.experimental.pallas import tpu as pltpu


def weighted_dist_kernel(ctx_ref, dist_ref, pkg_ref, proj_ref, mask_ref,
                         w1_ref, b1_ref, w2_ref, b2_ref, w3_ref, b3_ref,
                         wo_ref, bo_ref, out_ref):
    # ---- MLP: (Linear + ReLU) x3, then Linear -> 8 padded params (7 real + 1 pad) ----
    # Dropout p=0.0 is the identity, so it is omitted.
    # Layer 1 on the MXU in bf16 (casts are no-ops when the inputs are already bf16);
    # accumulation stays f32 via preferred_element_type.
    ctx = ctx_ref[...].astype(jnp.bfloat16)
    w1 = w1_ref[...].astype(jnp.bfloat16)
    h = jnp.dot(ctx, w1, preferred_element_type=jnp.float32) + b1_ref[...]
    h = jnp.maximum(h, 0.0)
    h = jnp.dot(h, w2_ref[...], preferred_element_type=jnp.float32) + b2_ref[...]
    h = jnp.maximum(h, 0.0)
    h = jnp.dot(h, w3_ref[...], preferred_element_type=jnp.float32) + b3_ref[...]
    h = jnp.maximum(h, 0.0)
    params = jnp.dot(h, wo_ref[...], preferred_element_type=jnp.float32) + bo_ref[...]  # [Bb, 8]

    p0 = params[:, 0:1]
    p1 = params[:, 1:2]
    p2 = params[:, 2:3]
    p3 = params[:, 3:4]
    p4 = params[:, 4:5]

    # ---- locality gate: shared integer compares + selects ----
    dist = dist_ref[...]
    if jnp.issubdtype(pkg_ref.dtype, jnp.floating):
        # Matches torch's (proj + pkg).long() truncation on float inputs.
        loc = (proj_ref[...] + pkg_ref[...]).astype(jnp.int32)
    else:
        loc = proj_ref[...].astype(jnp.int32) + pkg_ref[...].astype(jnp.int32)
    c0 = loc == 0
    c1 = loc == 1
    c2 = loc == 2
    scale = jnp.where(c0, p0, jnp.where(c1, p1, jnp.where(c2, p3, 0.0)))
    offset = jnp.where(c1, p2, jnp.where(c2, p4, 0.0))
    score = dist * scale + offset

    # ---- fused log_softmax + masked logsumexp ----
    # logsumexp(log_softmax(score) + mask) = logsumexp(score + mask) - logsumexp(score).
    # Each logsumexp uses its own max so the masked term never underflows when the
    # global arg-max happens to be a masked entry.
    m = jnp.max(score, axis=-1, keepdims=True)
    s1 = jnp.sum(jnp.exp(score - m), axis=-1, keepdims=True)
    if jnp.issubdtype(mask_ref.dtype, jnp.floating):
        # Original semantics: additive log-mask.
        sm = score + mask_ref[...]
        m2 = jnp.max(sm, axis=-1, keepdims=True)
        s2 = jnp.sum(jnp.exp(sm - m2), axis=-1, keepdims=True)
    else:
        # Optimized semantics: int8/bool validity mask (nonzero = keep).
        valid = mask_ref[...] != 0
        m2 = jnp.max(jnp.where(valid, score, -jnp.inf), axis=-1, keepdims=True)
        s2 = jnp.sum(jnp.where(valid, jnp.exp(score - m2), 0.0), axis=-1, keepdims=True)
    lse = (m2 + jnp.log(s2)) - (m + jnp.log(s1))                       # [Bb, 1]

    # ---- pack: columns 0..6 = params, column 7 = logsumexp result ----
    col = jax.lax.broadcasted_iota(jnp.int32, params.shape, 1)
    out_ref[...] = jnp.where(col == (params.shape[1] - 1), lse, params).astype(out_ref.dtype)


def _pick_block_b(B, cap=1024, target_steps=4, align=32):
    """Fixed 32-aligned row block, capped for VMEM, aiming for >= target_steps grid
    steps (v7x has 2 TensorCores and the pipeline needs >= ~3 steps to overlap)."""
    bb = -(-B // target_steps)            # ceil(B / target_steps)
    bb = -(-bb // align) * align          # round up to a multiple of `align`
    bb = min(bb, cap)
    if bb >= B:
        return B                          # single full block is always layout-legal
    return bb


def weighted_dist_forward(context_vec, dist, pkg_l, proj_l, mask, weights,
                          *, block_b=None):
    """Run the fused Pallas kernel. Returns (logsumexp [B], params [B, 7]).

    `mask` may be either a floating additive log-mask (original module semantics) or
    an int8 validity mask (nonzero = keep) for reduced HBM traffic.
    `context_vec` / `pkg_l` / `proj_l` may arrive in compact dtypes (bf16 / int8)
    straight from the producer; no wrapper-side conversion passes are added.
    """
    B, D = context_vec.shape
    _, N = dist.shape
    w1, b1, w2, b2, w3, b3, wo, bo = weights
    H = w1.shape[1]
    K = wo.shape[1]
    K_pad = 8  # pad final projection; col 7 carries the lse

    wo_p = jnp.zeros((H, K_pad), wo.dtype).at[:, :K].set(wo)
    bo_p = jnp.zeros((1, K_pad), bo.dtype).at[:, :K].set(bo)

    if block_b is None:
        block_b = _pick_block_b(B)
    grid = (pl.cdiv(B, block_b),)         # masked partial last block; no divisor search

    def row_spec(n):
        return pl.BlockSpec((block_b, n), lambda i: (i, 0))

    def wt_spec(shape):
        # Same block index every grid step -> weights stay resident in VMEM.
        return pl.BlockSpec(shape, lambda i: (0, 0))

    combined = pl.pallas_call(
        weighted_dist_kernel,
        out_shape=jax.ShapeDtypeStruct((B, K_pad), jnp.float32),
        grid=grid,
        in_specs=[
            row_spec(D),       # context_vec (bf16 or f32)
            row_spec(N),       # dist
            row_spec(N),       # pkg_l (int8 or float)
            row_spec(N),       # proj_l (int8 or float)
            row_spec(N),       # mask (int8 validity or float additive)
            wt_spec((D, H)), wt_spec((1, H)),          # layer 1
            wt_spec((H, H)), wt_spec((1, H)),          # layer 2
            wt_spec((H, H)), wt_spec((1, H)),          # layer 3
            wt_spec((H, K_pad)), wt_spec((1, K_pad)),  # output layer (padded)
        ],
        out_specs=row_spec(K_pad),
        compiler_params=pltpu.CompilerParams(
            dimension_semantics=("parallel",),
            vmem_limit_bytes=32 * 1024 * 1024),  # headroom on v5e's 16 MiB scoped default
    )(context_vec, dist, pkg_l, proj_l, mask,
      w1, b1, w2, b2, w3, b3, wo_p, bo_p)

    return combined[:, K_pad - 1], combined[:, :K]


def _reference(context_vec, dist, pkg_l, proj_l, idx_mask, weights):
    w1, b1, w2, b2, w3, b3, wo, bo = weights
    ctx = context_vec.astype(jnp.float32)
    h = jnp.maximum(ctx @ w1.astype(jnp.float32) + b1, 0.0)
    h = jnp.maximum(h @ w2 + b2, 0.0)
    h = jnp.maximum(h @ w3 + b3, 0.0)
    params = h @ wo + bo
    loc = proj_l.astype(jnp.float32) + pkg_l.astype(jnp.float32)
    f = jax.nn.one_hot(loc.astype(jnp.int32), 3, axis=0)
    score = (f[0] * (params[:, 0][:, None] * dist)
             + f[1] * (params[:, 1][:, None] * dist + params[:, 2][:, None])
             + f[2] * (params[:, 3][:, None] * dist + params[:, 4][:, None]))
    log_probs = jax.nn.log_softmax(score, axis=-1)
    return jax.scipy.special.logsumexp(log_probs + idx_mask, axis=-1), params


if __name__ == "__main__":
    # TODO(synk): the original forward's .cuda() transfers and debug print() calls have
    # no computational effect and are not translated.
    B, N, D, H, K = 8, 128, 1024, 32, 7

    key = jax.random.PRNGKey(0)
    ks = jax.random.split(key, 16)

    # Producers emit the compact dtypes directly (no wrapper-side conversion passes).
    context_vec = jax.random.normal(ks[0], (B, D), dtype=jnp.float32).astype(jnp.bfloat16)
    dist = jax.random.normal(ks[1], (B, N), dtype=jnp.float32)
    pkg_l = jax.random.randint(ks[2], (B, N), 0, 2).astype(jnp.int8)
    proj_l = jax.random.randint(ks[3], (B, N), 0, 2).astype(jnp.int8)
    valid = jax.random.bernoulli(ks[4], 0.5, (B, N))
    valid = valid.at[:, 0].set(True)  # guarantee at least one valid index per row
    valid_i8 = valid.astype(jnp.int8)

    scale = 0.05
    w1 = (scale * jax.random.normal(ks[5], (D, H), dtype=jnp.float32)).astype(jnp.bfloat16)
    b1 = scale * jax.random.normal(ks[6], (1, H), dtype=jnp.float32)
    w2 = scale * jax.random.normal(ks[7], (H, H), dtype=jnp.float32)
    b2 = scale * jax.random.normal(ks[8], (1, H), dtype=jnp.float32)
    w3 = scale * jax.random.normal(ks[9], (H, H), dtype=jnp.float32)
    b3 = scale * jax.random.normal(ks[10], (1, H), dtype=jnp.float32)
    wo = scale * jax.random.normal(ks[11], (H, K), dtype=jnp.float32)
    bo = scale * jax.random.normal(ks[12], (1, K), dtype=jnp.float32)
    weights = (w1, b1, w2, b2, w3, b3, wo, bo)

    idx_mask = jnp.where(valid, 0.0, -1e9).astype(jnp.float32)
    ref_out, ref_params = _reference(context_vec, dist, pkg_l, proj_l, idx_mask, weights)

    # Path 1: optimized dtypes (bf16 context, int8 locality inputs, int8 validity mask).
    out, params = weighted_dist_forward(context_vec, dist, pkg_l, proj_l,
                                        valid_i8, weights)
    jax.block_until_ready((out, params))
    assert jnp.allclose(out, ref_out, atol=1e-4, rtol=1e-4)
    assert jnp.allclose(params, ref_params, atol=1e-4, rtol=1e-4)

    # Path 2: original float interface (f32 context/locality, additive -1e9 mask).
    out2, params2 = weighted_dist_forward(context_vec.astype(jnp.float32), dist,
                                          pkg_l.astype(jnp.float32),
                                          proj_l.astype(jnp.float32),
                                          idx_mask, weights)
    jax.block_until_ready((out2, params2))
    assert jnp.allclose(out2, ref_out, atol=1e-4, rtol=1e-4)
    assert jnp.allclose(params2, ref_params, atol=1e-4, rtol=1e-4)

    print("KERNEL_OK")
</pallas_src>

<mosaic_0001>
module attributes {stable_mosaic.version = 11 : i64} {
  func.func @weighted_dist_kernel(%arg0: i32, %arg1: memref<8x1024xbf16, #tpu.memory_space<vmem>>, %arg2: memref<8x128xf32, #tpu.memory_space<vmem>>, %arg3: memref<8x128xi8, #tpu.memory_space<vmem>>, %arg4: memref<8x128xi8, #tpu.memory_space<vmem>>, %arg5: memref<8x128xi8, #tpu.memory_space<vmem>>, %arg6: memref<1024x32xbf16, #tpu.memory_space<vmem>>, %arg7: memref<1x32xf32, #tpu.memory_space<vmem>>, %arg8: memref<32x32xf32, #tpu.memory_space<vmem>>, %arg9: memref<1x32xf32, #tpu.memory_space<vmem>>, %arg10: memref<32x32xf32, #tpu.memory_space<vmem>>, %arg11: memref<1x32xf32, #tpu.memory_space<vmem>>, %arg12: memref<32x8xf32, #tpu.memory_space<vmem>>, %arg13: memref<1x8xf32, #tpu.memory_space<vmem>>, %arg14: memref<8x8xf32, #tpu.memory_space<vmem>>) attributes {dimension_semantics = [#tpu.dimension_semantics<parallel>], iteration_bounds = array<i64: 1>, scalar_prefetch = 0 : i64, scratch_operands = 0 : i64, tpu.core_type = #tpu.core_type<tc>, window_params = [{transform_indices = @transform_0, window_bounds = array<i64: 8, 1024>}, {transform_indices = @transform_1, window_bounds = array<i64: 8, 128>}, {transform_indices = @transform_2, window_bounds = array<i64: 8, 128>}, {transform_indices = @transform_3, window_bounds = array<i64: 8, 128>}, {transform_indices = @transform_4, window_bounds = array<i64: 8, 128>}, {pipeline_mode = #tpu.pipeline_mode<synchronous>, transform_indices = @transform_5, window_bounds = array<i64: 1024, 32>}, {pipeline_mode = #tpu.pipeline_mode<synchronous>, transform_indices = @transform_6, window_bounds = array<i64: 1, 32>}, {pipeline_mode = #tpu.pipeline_mode<synchronous>, transform_indices = @transform_7, window_bounds = array<i64: 32, 32>}, {pipeline_mode = #tpu.pipeline_mode<synchronous>, transform_indices = @transform_8, window_bounds = array<i64: 1, 32>}, {pipeline_mode = #tpu.pipeline_mode<synchronous>, transform_indices = @transform_9, window_bounds = array<i64: 32, 32>}, {pipeline_mode = #tpu.pipeline_mode<synchronous>, transform_indices = @transform_10, window_bounds = array<i64: 1, 32>}, {pipeline_mode = #tpu.pipeline_mode<synchronous>, transform_indices = @transform_11, window_bounds = array<i64: 32, 8>}, {pipeline_mode = #tpu.pipeline_mode<synchronous>, transform_indices = @transform_12, window_bounds = array<i64: 1, 8>}, {transform_indices = @transform_13, window_bounds = array<i64: 8, 8>}]} {
    %c0 = arith.constant 0 : index
    %c0_0 = arith.constant 0 : index
    %0 = vector.load %arg1[%c0, %c0_0] : memref<8x1024xbf16, #tpu.memory_space<vmem>>, vector<8x1024xbf16>
    %c0_1 = arith.constant 0 : index
    %c0_2 = arith.constant 0 : index
    %1 = vector.load %arg6[%c0_1, %c0_2] : memref<1024x32xbf16, #tpu.memory_space<vmem>>, vector<1024x32xbf16>
    %cst = arith.constant dense<0.000000e+00> : vector<8x32xf32>
    %2 = tpu.matmul %0, %1, %cst {dimension_numbers = #tpu.dot_dimension_numbers<[1], [0], [0], [1], [0, 0, 1, 1], [], []>} : vector<8x1024xbf16>, vector<1024x32xbf16>, vector<8x32xf32> -> vector<8x32xf32>
    %c0_3 = arith.constant 0 : index
    %c0_4 = arith.constant 0 : index
    %3 = vector.load %arg7[%c0_3, %c0_4] : memref<1x32xf32, #tpu.memory_space<vmem>>, vector<1x32xf32>
    %4 = vector.broadcast %3 : vector<1x32xf32> to vector<8x32xf32>
    %5 = arith.addf %2, %4 : vector<8x32xf32>
    %cst_5 = arith.constant 0.000000e+00 : f32
    %6 = vector.broadcast %cst_5 : f32 to vector<8x32xf32>
    %7 = arith.maximumf %5, %6 : vector<8x32xf32>
    %c0_6 = arith.constant 0 : index
    %c0_7 = arith.constant 0 : index
    %8 = vector.load %arg8[%c0_6, %c0_7] : memref<32x32xf32, #tpu.memory_space<vmem>>, vector<32x32xf32>
    %cst_8 = arith.constant dense<0.000000e+00> : vector<8x32xf32>
    %9 = tpu.matmul %7, %8, %cst_8 {dimension_numbers = #tpu.dot_dimension_numbers<[1], [0], [0], [1], [0, 0, 1, 1], [], []>} : vector<8x32xf32>, vector<32x32xf32>, vector<8x32xf32> -> vector<8x32xf32>
    %c0_9 = arith.constant 0 : index
    %c0_10 = arith.constant 0 : index
    %10 = vector.load %arg9[%c0_9, %c0_10] : memref<1x32xf32, #tpu.memory_space<vmem>>, vector<1x32xf32>
    %11 = vector.broadcast %10 : vector<1x32xf32> to vector<8x32xf32>
    %12 = arith.addf %9, %11 : vector<8x32xf32>
    %cst_11 = arith.constant 0.000000e+00 : f32
    %13 = vector.broadcast %cst_11 : f32 to vector<8x32xf32>
    %14 = arith.maximumf %12, %13 : vector<8x32xf32>
    %c0_12 = arith.constant 0 : index
    %c0_13 = arith.constant 0 : index
    %15 = vector.load %arg10[%c0_12, %c0_13] : memref<32x32xf32, #tpu.memory_space<vmem>>, vector<32x32xf32>
    %cst_14 = arith.constant dense<0.000000e+00> : vector<8x32xf32>
    %16 = tpu.matmul %14, %15, %cst_14 {dimension_numbers = #tpu.dot_dimension_numbers<[1], [0], [0], [1], [0, 0, 1, 1], [], []>} : vector<8x32xf32>, vector<32x32xf32>, vector<8x32xf32> -> vector<8x32xf32>
    %c0_15 = arith.constant 0 : index
    %c0_16 = arith.constant 0 : index
    %17 = vector.load %arg11[%c0_15, %c0_16] : memref<1x32xf32, #tpu.memory_space<vmem>>, vector<1x32xf32>
    %18 = vector.broadcast %17 : vector<1x32xf32> to vector<8x32xf32>
    %19 = arith.addf %16, %18 : vector<8x32xf32>
    %cst_17 = arith.constant 0.000000e+00 : f32
    %20 = vector.broadcast %cst_17 : f32 to vector<8x32xf32>
    %21 = arith.maximumf %19, %20 : vector<8x32xf32>
    %c0_18 = arith.constant 0 : index
    %c0_19 = arith.constant 0 : index
    %22 = vector.load %arg12[%c0_18, %c0_19] : memref<32x8xf32, #tpu.memory_space<vmem>>, vector<32x8xf32>
    %cst_20 = arith.constant dense<0.000000e+00> : vector<8x8xf32>
    %23 = tpu.matmul %21, %22, %cst_20 {dimension_numbers = #tpu.dot_dimension_numbers<[1], [0], [0], [1], [0, 0, 1, 1], [], []>} : vector<8x32xf32>, vector<32x8xf32>, vector<8x8xf32> -> vector<8x8xf32>
    %c0_21 = arith.constant 0 : index
    %c0_22 = arith.constant 0 : index
    %24 = vector.load %arg13[%c0_21, %c0_22] : memref<1x8xf32, #tpu.memory_space<vmem>>, vector<1x8xf32>
    %25 = vector.broadcast %24 : vector<1x8xf32> to vector<8x8xf32>
    %26 = arith.addf %23, %25 : vector<8x8xf32>
    %27 = vector.extract_strided_slice %26 {offsets = [0, 0], sizes = [8, 1], strides = [1, 1]} : vector<8x8xf32> to vector<8x1xf32>
    %28 = vector.extract_strided_slice %26 {offsets = [0, 1], sizes = [8, 1], strides = [1, 1]} : vector<8x8xf32> to vector<8x1xf32>
    %29 = vector.extract_strided_slice %26 {offsets = [0, 2], sizes = [8, 1], strides = [1, 1]} : vector<8x8xf32> to vector<8x1xf32>
    %30 = vector.extract_strided_slice %26 {offsets = [0, 3], sizes = [8, 1], strides = [1, 1]} : vector<8x8xf32> to vector<8x1xf32>
    %31 = vector.extract_strided_slice %26 {offsets = [0, 4], sizes = [8, 1], strides = [1, 1]} : vector<8x8xf32> to vector<8x1xf32>
    %c0_23 = arith.constant 0 : index
    %c0_24 = arith.constant 0 : index
    %32 = vector.load %arg2[%c0_23, %c0_24] : memref<8x128xf32, #tpu.memory_space<vmem>>, vector<8x128xf32>
    %c0_25 = arith.constant 0 : index
    %c0_26 = arith.constant 0 : index
    %33 = vector.load %arg4[%c0_25, %c0_26] : memref<8x128xi8, #tpu.memory_space<vmem>>, vector<8x128xi8>
    %34 = arith.extsi %33 : vector<8x128xi8> to vector<8x128xi32>
    %c0_27 = arith.constant 0 : index
    %c0_28 = arith.constant 0 : index
    %35 = vector.load %arg3[%c0_27, %c0_28] : memref<8x128xi8, #tpu.memory_space<vmem>>, vector<8x128xi8>
    %36 = arith.extsi %35 : vector<8x128xi8> to vector<8x128xi32>
    %37 = arith.addi %34, %36 : vector<8x128xi32>
    %c0_i32 = arith.constant 0 : i32
    %38 = vector.broadcast %c0_i32 : i32 to vector<8x128xi32>
    %39 = arith.cmpi eq, %37, %38 : vector<8x128xi32>
    %c1_i32 = arith.constant 1 : i32
    %40 = vector.broadcast %c1_i32 : i32 to vector<8x128xi32>
    %41 = arith.cmpi eq, %37, %40 : vector<8x128xi32>
    %c2_i32 = arith.constant 2 : i32
    %42 = vector.broadcast %c2_i32 : i32 to vector<8x128xi32>
    %43 = arith.cmpi eq, %37, %42 : vector<8x128xi32>
    %cst_29 = arith.constant 0.000000e+00 : f32
    %44 = vector.shape_cast %30 : vector<8x1xf32> to vector<8x1xf32>
    %45 = vector.broadcast %44 : vector<8x1xf32> to vector<8x128xf32>
    %46 = vector.broadcast %cst_29 : f32 to vector<8x128xf32>
    %47 = arith.select %43, %45, %46 : vector<8x128xi1>, vector<8x128xf32>
    %48 = vector.shape_cast %28 : vector<8x1xf32> to vector<8x1xf32>
    %49 = vector.broadcast %48 : vector<8x1xf32> to vector<8x128xf32>
    %50 = arith.select %41, %49, %47 : vector<8x128xi1>, vector<8x128xf32>
    %51 = vector.shape_cast %27 : vector<8x1xf32> to vector<8x1xf32>
    %52 = vector.broadcast %51 : vector<8x1xf32> to vector<8x128xf32>
    %53 = arith.select %39, %52, %50 : vector<8x128xi1>, vector<8x128xf32>
    %cst_30 = arith.constant 0.000000e+00 : f32
    %54 = vector.shape_cast %31 : vector<8x1xf32> to vector<8x1xf32>
    %55 = vector.broadcast %54 : vector<8x1xf32> to vector<8x128xf32>
    %56 = vector.broadcast %cst_30 : f32 to vector<8x128xf32>
    %57 = arith.select %43, %55, %56 : vector<8x128xi1>, vector<8x128xf32>
    %58 = vector.shape_cast %29 : vector<8x1xf32> to vector<8x1xf32>
    %59 = vector.broadcast %58 : vector<8x1xf32> to vector<8x128xf32>
    %60 = arith.select %41, %59, %57 : vector<8x128xi1>, vector<8x128xf32>
    %61 = arith.mulf %32, %53 : vector<8x128xf32>
    %62 = arith.addf %61, %60 : vector<8x128xf32>
    %cst_31 = arith.constant dense<0xFF800000> : vector<8xf32>
    %63 = vector.multi_reduction <maximumf>, %62, %cst_31 [1] : vector<8x128xf32> to vector<8xf32>
    %64 = vector.shape_cast %63 : vector<8xf32> to vector<8x1xf32>
    %65 = vector.broadcast %64 : vector<8x1xf32> to vector<8x128xf32>
    %66 = arith.subf %62, %65 : vector<8x128xf32>
    %67 = math.exp %66 : vector<8x128xf32>
    %cst_32 = arith.constant dense<0.000000e+00> : vector<8xf32>
    %68 = vector.multi_reduction <add>, %67, %cst_32 [1] : vector<8x128xf32> to vector<8xf32>
    %69 = vector.shape_cast %68 : vector<8xf32> to vector<8x1xf32>
    %c0_33 = arith.constant 0 : index
    %c0_34 = arith.constant 0 : index
    %70 = vector.load %arg5[%c0_33, %c0_34] : memref<8x128xi8, #tpu.memory_space<vmem>>, vector<8x128xi8>
    %c0_i8 = arith.constant 0 : i8
    %71 = vector.broadcast %c0_i8 : i8 to vector<8x128xi8>
    %72 = arith.cmpi ne, %70, %71 : vector<8x128xi8>
    %cst_35 = arith.constant 0xFF800000 : f32
    %73 = vector.broadcast %cst_35 : f32 to vector<8x128xf32>
    %74 = arith.select %72, %62, %73 : vector<8x128xi1>, vector<8x128xf32>
    %cst_36 = arith.constant dense<0xFF800000> : vector<8xf32>
    %75 = vector.multi_reduction <maximumf>, %74, %cst_36 [1] : vector<8x128xf32> to vector<8xf32>
    %76 = vector.shape_cast %75 : vector<8xf32> to vector<8x1xf32>
    %77 = vector.broadcast %76 : vector<8x1xf32> to vector<8x128xf32>
    %78 = arith.subf %62, %77 : vector<8x128xf32>
    %79 = math.exp %78 : vector<8x128xf32>
    %cst_37 = arith.constant 0.000000e+00 : f32
    %80 = vector.broadcast %cst_37 : f32 to vector<8x128xf32>
    %81 = arith.select %72, %79, %80 : vector<8x128xi1>, vector<8x128xf32>
    %cst_38 = arith.constant dense<0.000000e+00> : vector<8xf32>
    %82 = vector.multi_reduction <add>, %81, %cst_38 [1] : vector<8x128xf32> to vector<8xf32>
    %83 = vector.shape_cast %82 : vector<8xf32> to vector<8x1xf32>
    %84 = math.log %83 : vector<8x1xf32>
    %85 = arith.addf %76, %84 : vector<8x1xf32>
    %86 = math.log %69 : vector<8x1xf32>
    %87 = arith.addf %64, %86 : vector<8x1xf32>
    %88 = arith.subf %85, %87 : vector<8x1xf32>
    %89 = tpu.iota {dimensions = array<i32: 1>} : vector<8x8xi32>
    %c7_i32 = arith.constant 7 : i32
    %90 = vector.broadcast %c7_i32 : i32 to vector<8x8xi32>
    %91 = arith.cmpi eq, %89, %90 : vector<8x8xi32>
    %92 = vector.shape_cast %88 : vector<8x1xf32> to vector<8x1xf32>
    %93 = vector.broadcast %92 : vector<8x1xf32> to vector<8x8xf32>
    %94 = arith.select %91, %93, %26 : vector<8x8xi1>, vector<8x8xf32>
    %c0_39 = arith.constant 0 : index
    %c0_40 = arith.constant 0 : index
    %95 = vector.load %arg14[%c0_39, %c0_40] : memref<8x8xf32, #tpu.memory_space<vmem>>, vector<8x8xf32>
    tpu.vector_store %arg14[%c0_39, %c0_40], %94 {strides = array<i32>} : memref<8x8xf32, #tpu.memory_space<vmem>>, vector<8x8xf32>,
    return
  }
  func.func @transform_0(%arg0: i32) -> (i32, i32) {
    %c0_i32 = arith.constant 0 : i32
    %c0_i32_0 = arith.constant 0 : i32
    return %arg0, %c0_i32 : i32, i32
  }
  func.func @transform_1(%arg0: i32) -> (i32, i32) {
    %c0_i32 = arith.constant 0 : i32
    %c0_i32_0 = arith.constant 0 : i32
    return %arg0, %c0_i32 : i32, i32
  }
  func.func @transform_2(%arg0: i32) -> (i32, i32) {
    %c0_i32 = arith.constant 0 : i32
    %c0_i32_0 = arith.constant 0 : i32
    return %arg0, %c0_i32 : i32, i32
  }
  func.func @transform_3(%arg0: i32) -> (i32, i32) {
    %c0_i32 = arith.constant 0 : i32
    %c0_i32_0 = arith.constant 0 : i32
    return %arg0, %c0_i32 : i32, i32
  }
  func.func @transform_4(%arg0: i32) -> (i32, i32) {
    %c0_i32 = arith.constant 0 : i32
    %c0_i32_0 = arith.constant 0 : i32
    return %arg0, %c0_i32 : i32, i32
  }
  func.func @transform_5(%arg0: i32) -> (i32, i32) {
    %c0_i32 = arith.constant 0 : i32
    %c0_i32_0 = arith.constant 0 : i32
    %c0_i32_1 = arith.constant 0 : i32
    return %c0_i32, %c0_i32_0 : i32, i32
  }
  func.func @transform_6(%arg0: i32) -> (i32, i32) {
    %c0_i32 = arith.constant 0 : i32
    %c0_i32_0 = arith.constant 0 : i32
    %c0_i32_1 = arith.constant 0 : i32
    return %c0_i32, %c0_i32_0 : i32, i32
  }
  func.func @transform_7(%arg0: i32) -> (i32, i32) {
    %c0_i32 = arith.constant 0 : i32
    %c0_i32_0 = arith.constant 0 : i32
    %c0_i32_1 = arith.constant 0 : i32
    return %c0_i32, %c0_i32_0 : i32, i32
  }
  func.func @transform_8(%arg0: i32) -> (i32, i32) {
    %c0_i32 = arith.constant 0 : i32
    %c0_i32_0 = arith.constant 0 : i32
    %c0_i32_1 = arith.constant 0 : i32
    return %c0_i32, %c0_i32_0 : i32, i32
  }
  func.func @transform_9(%arg0: i32) -> (i32, i32) {
    %c0_i32 = arith.constant 0 : i32
    %c0_i32_0 = arith.constant 0 : i32
    %c0_i32_1 = arith.constant 0 : i32
    return %c0_i32, %c0_i32_0 : i32, i32
  }
  func.func @transform_10(%arg0: i32) -> (i32, i32) {
    %c0_i32 = arith.constant 0 : i32
    %c0_i32_0 = arith.constant 0 : i32
    %c0_i32_1 = arith.constant 0 : i32
    return %c0_i32, %c0_i32_0 : i32, i32
  }
  func.func @transform_11(%arg0: i32) -> (i32, i32) {
    %c0_i32 = arith.constant 0 : i32
    %c0_i32_0 = arith.constant 0 : i32
    %c0_i32_1 = arith.constant 0 : i32
    return %c0_i32, %c0_i32_0 : i32, i32
  }
  func.func @transform_12(%arg0: i32) -> (i32, i32) {
    %c0_i32 = arith.constant 0 : i32
    %c0_i32_0 = arith.constant 0 : i32
    %c0_i32_1 = arith.constant 0 : i32
    return %c0_i32, %c0_i32_0 : i32, i32
  }
  func.func @transform_13(%arg0: i32) -> (i32, i32) {
    %c0_i32 = arith.constant 0 : i32
    %c0_i32_0 = arith.constant 0 : i32
    return %arg0, %c0_i32 : i32, i32
  }
}

</mosaic_0001>

<llo_original>
// kernel: tpu_custom_call.1
$region0: #{tpu_custom_call.1}
  #allocation0 [shape = 'u32[]', space=smem, size = 0x4, offset = 0x4, fixed_abs, tag = 'smem constant byte address 0x4 - core index']
  #allocation1 [shape = 'u32[72,128]{1,0:T(1,128)}', space=vmem, size = 0x9000, scoped, tag = 'internal scratch']
  %s0 = inlined_call_operand.vmem [shape: bf16[8,1024], index: 0, kind: input, shape index: {}]
  %s1 = inlined_call_operand.vmem [shape: f32[8,128], index: 1, kind: input, shape index: {}]
  %s2 = inlined_call_operand.vmem [shape: s8[8,128], index: 2, kind: input, shape index: {}]
  %s3 = inlined_call_operand.vmem [shape: s8[8,128], index: 3, kind: input, shape index: {}]
  %s4 = inlined_call_operand.vmem [shape: s8[8,128], index: 4, kind: input, shape index: {}]
  %s5 = inlined_call_operand.vmem [shape: bf16[1024,32], index: 5, kind: input, shape index: {}]
  %s6 = inlined_call_operand.vmem [shape: f32[1,32], index: 6, kind: input, shape index: {}]
  %s7 = inlined_call_operand.vmem [shape: f32[32,32], index: 7, kind: input, shape index: {}]
  %s8 = inlined_call_operand.vmem [shape: f32[1,32], index: 8, kind: input, shape index: {}]
  %s9 = inlined_call_operand.vmem [shape: f32[32,32], index: 9, kind: input, shape index: {}]
  %s10 = inlined_call_operand.vmem [shape: f32[1,32], index: 10, kind: input, shape index: {}]
  %s11 = inlined_call_operand.vmem [shape: f32[32,8], index: 11, kind: input, shape index: {}]
  %s12 = inlined_call_operand.vmem [shape: f32[1,8], index: 12, kind: input, shape index: {}]
  %s13 = inlined_call_operand.hbm [shape: f32[8,8], index: 13, kind: output, shape index: {}]
  %s14 = sld [smem:[#allocation0]]
  $region62: #{tpu_custom_call.1} parent=0
    _
  %s16 = ssub.s32 1, %s14
  %s17 = scalar_select 0, %s16, %s14
  $region1: #{tpu_custom_call.1} parent=0
    #allocation2 [shape = 'u8[4096]{0}', space=vmem, size = 0x1000, scoped, tag = 'output window, operand 0, single buffered']
    #allocation3 [shape = 's32[1]{0}', space=sflag, size = 0x4, scoped, tag = 'scoped memory for tpu_custom_call.1']
    %18 = vsyncpa [#allocation3], 0
    // Predicated region
    $region2: #{tpu_custom_call.1} parent=1 // pred_check
      _
    $region3: #{tpu_custom_call.1} parent=1 // pred_check_branch
      %20 = sbr.rel (0) target = $region5
    $region4: #{tpu_custom_call.1} parent=1 // pred_region
      _
    $region5: #{tpu_custom_call.1} parent=1 // pred_fallthru
      _
    // Predicated region
    $region6: #{tpu_custom_call.1} parent=1 // pred_check
      _
    $region7: #{tpu_custom_call.1} parent=1 // pred_check_branch
      %22 = sbr.rel (0) target = $region9
    $region8: #{tpu_custom_call.1} parent=1 // pred_region
      _
    $region9: #{tpu_custom_call.1} parent=1 // pred_fallthru
      _
    // Predicated region
    $region10: #{tpu_custom_call.1} parent=1 // pred_check
      _
    $region11: #{tpu_custom_call.1} parent=1 // pred_check_branch
      %24 = sbr.rel (0) target = $region13
    $region12: #{tpu_custom_call.1} parent=1 // pred_region
      _
    $region13: #{tpu_custom_call.1} parent=1 // pred_fallthru
      _
    // Predicated region
    $region14: #{tpu_custom_call.1} parent=1 // pred_check
      _
    $region15: #{tpu_custom_call.1} parent=1 // pred_check_branch
      %26 = sbr.rel (0) target = $region17
    $region16: #{tpu_custom_call.1} parent=1 // pred_region
      _
    $region17: #{tpu_custom_call.1} parent=1 // pred_fallthru
      _
    // Predicated region
    $region18: #{tpu_custom_call.1} parent=1 // pred_check
      _
    $region19: #{tpu_custom_call.1} parent=1 // pred_check_branch
      %28 = sbr.rel (0) target = $region21
    $region20: #{tpu_custom_call.1} parent=1 // pred_region
      _
    $region21: #{tpu_custom_call.1} parent=1 // pred_fallthru
      _
    // Predicated region
    $region22: #{tpu_custom_call.1} parent=1 // pred_check
      _
    $region23: #{tpu_custom_call.1} parent=1 // pred_check_branch
      %30 = sbr.rel (0) target = $region25
    $region24: #{tpu_custom_call.1} parent=1 // pred_region
      _
    $region25: #{tpu_custom_call.1} parent=1 // pred_fallthru
      _
    // Predicated region
    $region26: #{tpu_custom_call.1} parent=1 // pred_check
      _
    $region27: #{tpu_custom_call.1} parent=1 // pred_check_branch
      %32 = sbr.rel (0) target = $region29
    $region28: #{tpu_custom_call.1} parent=1 // pred_region
      _
    $region29: #{tpu_custom_call.1} parent=1 // pred_fallthru
      _
    // Predicated region
    $region30: #{tpu_custom_call.1} parent=1 // pred_check
      _
    $region31: #{tpu_custom_call.1} parent=1 // pred_check_branch
      %34 = sbr.rel (0) target = $region33
    $region32: #{tpu_custom_call.1} parent=1 // pred_region
      _
    $region33: #{tpu_custom_call.1} parent=1 // pred_fallthru
      _
    // Predicated region
    $region34: #{tpu_custom_call.1} parent=1 // pred_check
      _
    $region35: #{tpu_custom_call.1} parent=1 // pred_check_branch
      %36 = sbr.rel (0) target = $region37
    $region36: #{tpu_custom_call.1} parent=1 // pred_region
      _
    $region37: #{tpu_custom_call.1} parent=1 // pred_fallthru
      _
    // Predicated region
    $region38: #{tpu_custom_call.1} parent=1 // pred_check
      _
    $region39: #{tpu_custom_call.1} parent=1 // pred_check_branch
      %38 = sbr.rel (0) target = $region41
    $region40: #{tpu_custom_call.1} parent=1 // pred_region
      _
    $region41: #{tpu_custom_call.1} parent=1 // pred_fallthru
      _
    // Predicated region
    $region42: #{tpu_custom_call.1} parent=1 // pred_check
      _
    $region43: #{tpu_custom_call.1} parent=1 // pred_check_branch
      %40 = sbr.rel (0) target = $region45
    $region44: #{tpu_custom_call.1} parent=1 // pred_region
      _
    $region45: #{tpu_custom_call.1} parent=1 // pred_fallthru
      _
    // Predicated region
    $region46: #{tpu_custom_call.1} parent=1 // pred_check
      _
    $region47: #{tpu_custom_call.1} parent=1 // pred_check_branch
      %42 = sbr.rel (0) target = $region49
    $region48: #{tpu_custom_call.1} parent=1 // pred_region
      _
    $region49: #{tpu_custom_call.1} parent=1 // pred_fallthru
      _
    // Predicated region
    $region50: #{tpu_custom_call.1} parent=1 // pred_check
      _
    $region51: #{tpu_custom_call.1} parent=1 // pred_check_branch
      %44 = sbr.rel (0) target = $region53
    $region52: #{tpu_custom_call.1} parent=1 // pred_region
      _
    $region53: #{tpu_custom_call.1} parent=1 // pred_fallthru
      _
    %v47 = vld [vmem:[%s0] sm:$0xff]
    %v48 = vld [vmem:[%s0 + $0x8] sm:$0xff]
    %v49 = vld [vmem:[%s0 + $0x10] sm:$0xff]
    %v50 = vld [vmem:[%s0 + $0x18] sm:$0xff]
    %v51 = vld [vmem:[%s5] sm:$0xf]
    %v52 = vld [vmem:[%s5 + $0x4] sm:$0xf]
    %v53 = vld [vmem:[%s5 + $0x8] sm:$0xf]
    %v54 = vld [vmem:[%s5 + $0xc] sm:$0xf]
    %v55 = vld [vmem:[%s5 + $0x10] sm:$0xf]
    %v56 = vld [vmem:[%s5 + $0x14] sm:$0xf]
    %v57 = vld [vmem:[%s5 + $0x18] sm:$0xf]
    %v58 = vld [vmem:[%s5 + $0x1c] sm:$0xf]
    %v59 = vld [vmem:[%s5 + $0x20] sm:$0xf]
    %v60 = vld [vmem:[%s5 + $0x24] sm:$0xf]
    %v61 = vld [vmem:[%s5 + $0x28] sm:$0xf]
    %v62 = vld [vmem:[%s5 + $0x2c] sm:$0xf]
    %v63 = vld [vmem:[%s5 + $0x30] sm:$0xf]
    %v64 = vld [vmem:[%s5 + $0x34] sm:$0xf]
    %v65 = vld [vmem:[%s5 + $0x38] sm:$0xf]
    %v66 = vld [vmem:[%s5 + $0x3c] sm:$0xf]
    %v67 = vld [vmem:[%s5 + $0x40] sm:$0xf]
    %v68 = vld [vmem:[%s5 + $0x44] sm:$0xf]
    %v69 = vld [vmem:[%s5 + $0x48] sm:$0xf]
    %v70 = vld [vmem:[%s5 + $0x4c] sm:$0xf]
    %v71 = vld [vmem:[%s5 + $0x50] sm:$0xf]
    %v72 = vld [vmem:[%s5 + $0x54] sm:$0xf]
    %v73 = vld [vmem:[%s5 + $0x58] sm:$0xf]
    %v74 = vld [vmem:[%s5 + $0x5c] sm:$0xf]
    %v75 = vld [vmem:[%s5 + $0x60] sm:$0xf]
    %v76 = vld [vmem:[%s5 + $0x64] sm:$0xf]
    %v77 = vld [vmem:[%s5 + $0x68] sm:$0xf]
    %v78 = vld [vmem:[%s5 + $0x6c] sm:$0xf]
    %v79 = vld [vmem:[%s5 + $0x70] sm:$0xf]
    %v80 = vld [vmem:[%s5 + $0x74] sm:$0xf]
    %v81 = vld [vmem:[%s5 + $0x78] sm:$0xf]
    %v82 = vld [vmem:[%s5 + $0x7c] sm:$0xf]
    %v83 = vld [vmem:[%s5 + $0x80] sm:$0xf]
    %v84 = vld [vmem:[%s5 + $0x84] sm:$0xf]
    %v85 = vld [vmem:[%s5 + $0x88] sm:$0xf]
    %v86 = vld [vmem:[%s5 + $0x8c] sm:$0xf]
    %v87 = vld [vmem:[%s5 + $0x90] sm:$0xf]
    %v88 = vld [vmem:[%s5 + $0x94] sm:$0xf]
    %v89 = vld [vmem:[%s5 + $0x98] sm:$0xf]
    %v90 = vld [vmem:[%s5 + $0x9c] sm:$0xf]
    %v91 = vld [vmem:[%s5 + $0xa0] sm:$0xf]
    %v92 = vld [vmem:[%s5 + $0xa4] sm:$0xf]
    %v93 = vld [vmem:[%s5 + $0xa8] sm:$0xf]
    %v94 = vld [vmem:[%s5 + $0xac] sm:$0xf]
    %v95 = vld [vmem:[%s5 + $0xb0] sm:$0xf]
    %v96 = vld [vmem:[%s5 + $0xb4] sm:$0xf]
    %v97 = vld [vmem:[%s5 + $0xb8] sm:$0xf]
    %v98 = vld [vmem:[%s5 + $0xbc] sm:$0xf]
    %v99 = vld [vmem:[%s5 + $0xc0] sm:$0xf]
    %v100 = vld [vmem:[%s5 + $0xc4] sm:$0xf]
    %v101 = vld [vmem:[%s5 + $0xc8] sm:$0xf]
    %v102 = vld [vmem:[%s5 + $0xcc] sm:$0xf]
    %v103 = vld [vmem:[%s5 + $0xd0] sm:$0xf]
    %v104 = vld [vmem:[%s5 + $0xd4] sm:$0xf]
    %v105 = vld [vmem:[%s5 + $0xd8] sm:$0xf]
    %v106 = vld [vmem:[%s5 + $0xdc] sm:$0xf]
    %v107 = vld [vmem:[%s5 + $0xe0] sm:$0xf]
    %v108 = vld [vmem:[%s5 + $0xe4] sm:$0xf]
    %v109 = vld [vmem:[%s5 + $0xe8] sm:$0xf]
    %v110 = vld [vmem:[%s5 + $0xec] sm:$0xf]
    %v111 = vld [vmem:[%s5 + $0xf0] sm:$0xf]
    %v112 = vld [vmem:[%s5 + $0xf4] sm:$0xf]
    %v113 = vld [vmem:[%s5 + $0xf8] sm:$0xf]
    %v114 = vld [vmem:[%s5 + $0xfc] sm:$0xf]
    %v115 = vld [vmem:[%s5 + $0x100] sm:$0xf]
    %v116 = vld [vmem:[%s5 + $0x104] sm:$0xf]
    %v117 = vld [vmem:[%s5 + $0x108] sm:$0xf]
    %v118 = vld [vmem:[%s5 + $0x10c] sm:$0xf]
    %v119 = vld [vmem:[%s5 + $0x110] sm:$0xf]
    %v120 = vld [vmem:[%s5 + $0x114] sm:$0xf]
    %v121 = vld [vmem:[%s5 + $0x118] sm:$0xf]
    %v122 = vld [vmem:[%s5 + $0x11c] sm:$0xf]
    %v123 = vld [vmem:[%s5 + $0x120] sm:$0xf]
    %v124 = vld [vmem:[%s5 + $0x124] sm:$0xf]
    %v125 = vld [vmem:[%s5 + $0x128] sm:$0xf]
    %v126 = vld [vmem:[%s5 + $0x12c] sm:$0xf]
    %v127 = vld [vmem:[%s5 + $0x130] sm:$0xf]
    %v128 = vld [vmem:[%s5 + $0x134] sm:$0xf]
    %v129 = vld [vmem:[%s5 + $0x138] sm:$0xf]
    %v130 = vld [vmem:[%s5 + $0x13c] sm:$0xf]
    %v131 = vld [vmem:[%s5 + $0x140] sm:$0xf]
    %v132 = vld [vmem:[%s5 + $0x144] sm:$0xf]
    %v133 = vld [vmem:[%s5 + $0x148] sm:$0xf]
    %v134 = vld [vmem:[%s5 + $0x14c] sm:$0xf]
    %v135 = vld [vmem:[%s5 + $0x150] sm:$0xf]
    %v136 = vld [vmem:[%s5 + $0x154] sm:$0xf]
    %v137 = vld [vmem:[%s5 + $0x158] sm:$0xf]
    %v138 = vld [vmem:[%s5 + $0x15c] sm:$0xf]
    %v139 = vld [vmem:[%s5 + $0x160] sm:$0xf]
    %v140 = vld [vmem:[%s5 + $0x164] sm:$0xf]
    %v141 = vld [vmem:[%s5 + $0x168] sm:$0xf]
    %v142 = vld [vmem:[%s5 + $0x16c] sm:$0xf]
    %v143 = vld [vmem:[%s5 + $0x170] sm:$0xf]
    %v144 = vld [vmem:[%s5 + $0x174] sm:$0xf]
    %v145 = vld [vmem:[%s5 + $0x178] sm:$0xf]
    %v146 = vld [vmem:[%s5 + $0x17c] sm:$0xf]
    %v147 = vld [vmem:[%s5 + $0x180] sm:$0xf]
    %v148 = vld [vmem:[%s5 + $0x184] sm:$0xf]
    %v149 = vld [vmem:[%s5 + $0x188] sm:$0xf]
    %v150 = vld [vmem:[%s5 + $0x18c] sm:$0xf]
    %v151 = vld [vmem:[%s5 + $0x190] sm:$0xf]
    %v152 = vld [vmem:[%s5 + $0x194] sm:$0xf]
    %v153 = vld [vmem:[%s5 + $0x198] sm:$0xf]
    %v154 = vld [vmem:[%s5 + $0x19c] sm:$0xf]
    %v155 = vld [vmem:[%s5 + $0x1a0] sm:$0xf]
    %v156 = vld [vmem:[%s5 + $0x1a4] sm:$0xf]
    %v157 = vld [vmem:[%s5 + $0x1a8] sm:$0xf]
    %v158 = vld [vmem:[%s5 + $0x1ac] sm:$0xf]
    %v159 = vld [vmem:[%s5 + $0x1b0] sm:$0xf]
    %v160 = vld [vmem:[%s5 + $0x1b4] sm:$0xf]
    %v161 = vld [vmem:[%s5 + $0x1b8] sm:$0xf]
    %v162 = vld [vmem:[%s5 + $0x1bc] sm:$0xf]
    %v163 = vld [vmem:[%s5 + $0x1c0] sm:$0xf]
    %v164 = vld [vmem:[%s5 + $0x1c4] sm:$0xf]
    %v165 = vld [vmem:[%s5 + $0x1c8] sm:$0xf]
    %v166 = vld [vmem:[%s5 + $0x1cc] sm:$0xf]
    %v167 = vld [vmem:[%s5 + $0x1d0] sm:$0xf]
    %v168 = vld [vmem:[%s5 + $0x1d4] sm:$0xf]
    %v169 = vld [vmem:[%s5 + $0x1d8] sm:$0xf]
    %v170 = vld [vmem:[%s5 + $0x1dc] sm:$0xf]
    %v171 = vld [vmem:[%s5 + $0x1e0] sm:$0xf]
    %v172 = vld [vmem:[%s5 + $0x1e4] sm:$0xf]
    %v173 = vld [vmem:[%s5 + $0x1e8] sm:$0xf]
    %v174 = vld [vmem:[%s5 + $0x1ec] sm:$0xf]
    %v175 = vld [vmem:[%s5 + $0x1f0] sm:$0xf]
    %v176 = vld [vmem:[%s5 + $0x1f4] sm:$0xf]
    %v177 = vld [vmem:[%s5 + $0x1f8] sm:$0xf]
    %v178 = vld [vmem:[%s5 + $0x1fc] sm:$0xf]
    %v179 = vld [vmem:[%s6] sm:$0x1]
    %v181 = vperm.slane %v179, 0
    %v187 = vunpack.c.l.b16 %v47
    %v188 = vunpack.c.h.b16 %v47
    %v189 = vunpack.c.l.b16 %v48
    %v190 = vunpack.c.h.b16 %v48
    %v191 = vunpack.c.l.b16 %v49
    %v192 = vunpack.c.h.b16 %v49
    %v193 = vunpack.c.l.b16 %v50
    %v194 = vunpack.c.h.b16 %v50
    %v195 = vpack.c.b16 %v187, %v187
    %v196 = vpack.c.b16 %v188, %v188
    %v197 = vpack.c.b16 %v189, %v189
    %v198 = vpack.c.b16 %v190, %v190
    %v199 = vpack.c.b16 %v191, %v191
    %v200 = vpack.c.b16 %v192, %v192
    %v201 = vpack.c.b16 %v193, %v193
    %v202 = vpack.c.b16 %v194, %v194
    %v339 = vunpack.c.l.b16 %v51
    %v340 = vunpack.c.l.b16 %v52
    %v341 = vunpack.c.l.b16 %v53
    %v342 = vunpack.c.l.b16 %v54
    %v343 = vunpack.c.l.b16 %v55
    %v344 = vunpack.c.l.b16 %v56
    %v345 = vunpack.c.l.b16 %v57
    %v346 = vunpack.c.l.b16 %v58
    %v347 = vunpack.c.l.b16 %v59
    %v348 = vunpack.c.l.b16 %v60
    %v349 = vunpack.c.l.b16 %v61
    %v350 = vunpack.c.l.b16 %v62
    %v351 = vunpack.c.l.b16 %v63
    %v352 = vunpack.c.l.b16 %v64
    %v353 = vunpack.c.l.b16 %v65
    %v354 = vunpack.c.l.b16 %v66
    %v355 = vunpack.c.l.b16 %v67
    %v356 = vunpack.c.l.b16 %v68
    %v357 = vunpack.c.l.b16 %v69
    %v358 = vunpack.c.l.b16 %v70
    %v359 = vunpack.c.l.b16 %v71
    %v360 = vunpack.c.l.b16 %v72
    %v361 = vunpack.c.l.b16 %v73
    %v362 = vunpack.c.l.b16 %v74
    %v363 = vunpack.c.l.b16 %v75
    %v364 = vunpack.c.l.b16 %v76
    %v365 = vunpack.c.l.b16 %v77
    %v366 = vunpack.c.l.b16 %v78
    %v367 = vunpack.c.l.b16 %v79
    %v368 = vunpack.c.l.b16 %v80
    %v369 = vunpack.c.l.b16 %v81
    %v370 = vunpack.c.l.b16 %v82
    %v371 = vunpack.c.l.b16 %v83
    %v372 = vunpack.c.l.b16 %v84
    %v373 = vunpack.c.l.b16 %v85
    %v374 = vunpack.c.l.b16 %v86
    %v375 = vunpack.c.l.b16 %v87
    %v376 = vunpack.c.l.b16 %v88
    %v377 = vunpack.c.l.b16 %v89
    %v378 = vunpack.c.l.b16 %v90
    %v379 = vunpack.c.l.b16 %v91
    %v380 = vunpack.c.l.b16 %v92
    %v381 = vunpack.c.l.b16 %v93
    %v382 = vunpack.c.l.b16 %v94
    %v383 = vunpack.c.l.b16 %v95
    %v384 = vunpack.c.l.b16 %v96
    %v385 = vunpack.c.l.b16 %v97
    %v386 = vunpack.c.l.b16 %v98
    %v387 = vunpack.c.l.b16 %v99
    %v388 = vunpack.c.l.b16 %v100
    %v389 = vunpack.c.l.b16 %v101
    %v390 = vunpack.c.l.b16 %v102
    %v391 = vunpack.c.l.b16 %v103
    %v392 = vunpack.c.l.b16 %v104
    %v393 = vunpack.c.l.b16 %v105
    %v394 = vunpack.c.l.b16 %v106
    %v395 = vunpack.c.l.b16 %v107
    %v396 = vunpack.c.l.b16 %v108
    %v397 = vunpack.c.l.b16 %v109
    %v398 = vunpack.c.l.b16 %v110
    %v399 = vunpack.c.l.b16 %v111
    %v400 = vunpack.c.l.b16 %v112
    %v401 = vunpack.c.l.b16 %v113
    %v402 = vunpack.c.l.b16 %v114
    %v403 = vunpack.c.l.b16 %v115
    %v404 = vunpack.c.l.b16 %v116
    %v405 = vunpack.c.l.b16 %v117
    %v406 = vunpack.c.l.b16 %v118
    %v407 = vunpack.c.l.b16 %v119
    %v408 = vunpack.c.l.b16 %v120
    %v409 = vunpack.c.l.b16 %v121
    %v410 = vunpack.c.l.b16 %v122
    %v411 = vunpack.c.l.b16 %v123
    %v412 = vunpack.c.l.b16 %v124
    %v413 = vunpack.c.l.b16 %v125
    %v414 = vunpack.c.l.b16 %v126
    %v415 = vunpack.c.l.b16 %v127
    %v416 = vunpack.c.l.b16 %v128
    %v417 = vunpack.c.l.b16 %v129
    %v418 = vunpack.c.l.b16 %v130
    %v419 = vunpack.c.l.b16 %v131
    %v420 = vunpack.c.l.b16 %v132
    %v421 = vunpack.c.l.b16 %v133
    %v422 = vunpack.c.l.b16 %v134
    %v423 = vunpack.c.l.b16 %v135
    %v424 = vunpack.c.l.b16 %v136
    %v425 = vunpack.c.l.b16 %v137
    %v426 = vunpack.c.l.b16 %v138
    %v427 = vunpack.c.l.b16 %v139
    %v428 = vunpack.c.l.b16 %v140
    %v429 = vunpack.c.l.b16 %v141
    %v430 = vunpack.c.l.b16 %v142
    %v431 = vunpack.c.l.b16 %v143
    %v432 = vunpack.c.l.b16 %v144
    %v433 = vunpack.c.l.b16 %v145
    %v434 = vunpack.c.l.b16 %v146
    %v435 = vunpack.c.l.b16 %v147
    %v436 = vunpack.c.l.b16 %v148
    %v437 = vunpack.c.l.b16 %v149
    %v438 = vunpack.c.l.b16 %v150
    %v439 = vunpack.c.l.b16 %v151
    %v440 = vunpack.c.l.b16 %v152
    %v441 = vunpack.c.l.b16 %v153
    %v442 = vunpack.c.l.b16 %v154
    %v443 = vunpack.c.l.b16 %v155
    %v444 = vunpack.c.l.b16 %v156
    %v445 = vunpack.c.l.b16 %v157
    %v446 = vunpack.c.l.b16 %v158
    %v447 = vunpack.c.l.b16 %v159
    %v448 = vunpack.c.l.b16 %v160
    %v449 = vunpack.c.l.b16 %v161
    %v450 = vunpack.c.l.b16 %v162
    %v451 = vunpack.c.l.b16 %v163
    %v452 = vunpack.c.l.b16 %v164
    %v453 = vunpack.c.l.b16 %v165
    %v454 = vunpack.c.l.b16 %v166
    %v455 = vunpack.c.l.b16 %v167
    %v456 = vunpack.c.l.b16 %v168
    %v457 = vunpack.c.l.b16 %v169
    %v458 = vunpack.c.l.b16 %v170
    %v459 = vunpack.c.l.b16 %v171
    %v460 = vunpack.c.l.b16 %v172
    %v461 = vunpack.c.l.b16 %v173
    %v462 = vunpack.c.l.b16 %v174
    %v463 = vunpack.c.l.b16 %v175
    %v464 = vunpack.c.l.b16 %v176
    %v465 = vunpack.c.l.b16 %v177
    %v466 = vunpack.c.l.b16 %v178
    %v467 = vpack.c.b16 %v340, %v339
    %v468 = vpack.c.b16 %v342, %v341
    %v469 = vpack.c.b16 %v344, %v343
    %v470 = vpack.c.b16 %v346, %v345
    %v471 = vpack.c.b16 %v348, %v347
    %v472 = vpack.c.b16 %v350, %v349
    %v473 = vpack.c.b16 %v352, %v351
    %v474 = vpack.c.b16 %v354, %v353
    %v475 = vpack.c.b16 %v356, %v355
    %v476 = vpack.c.b16 %v358, %v357
    %v477 = vpack.c.b16 %v360, %v359
    %v478 = vpack.c.b16 %v362, %v361
    %v479 = vpack.c.b16 %v364, %v363
    %v480 = vpack.c.b16 %v366, %v365
    %v481 = vpack.c.b16 %v368, %v367
    %v482 = vpack.c.b16 %v370, %v369
    %v483 = vpack.c.b16 %v372, %v371
    %v484 = vpack.c.b16 %v374, %v373
    %v485 = vpack.c.b16 %v376, %v375
    %v486 = vpack.c.b16 %v378, %v377
    %v487 = vpack.c.b16 %v380, %v379
    %v488 = vpack.c.b16 %v382, %v381
    %v489 = vpack.c.b16 %v384, %v383
    %v490 = vpack.c.b16 %v386, %v385
    %v491 = vpack.c.b16 %v388, %v387
    %v492 = vpack.c.b16 %v390, %v389
    %v493 = vpack.c.b16 %v392, %v391
    %v494 = vpack.c.b16 %v394, %v393
    %v495 = vpack.c.b16 %v396, %v395
    %v496 = vpack.c.b16 %v398, %v397
    %v497 = vpack.c.b16 %v400, %v399
    %v498 = vpack.c.b16 %v402, %v401
    %v499 = vpack.c.b16 %v404, %v403
    %v500 = vpack.c.b16 %v406, %v405
    %v501 = vpack.c.b16 %v408, %v407
    %v502 = vpack.c.b16 %v410, %v409
    %v503 = vpack.c.b16 %v412, %v411
    %v504 = vpack.c.b16 %v414, %v413
    %v505 = vpack.c.b16 %v416, %v415
    %v506 = vpack.c.b16 %v418, %v417
    %v507 = vpack.c.b16 %v420, %v419
    %v508 = vpack.c.b16 %v422, %v421
    %v509 = vpack.c.b16 %v424, %v423
    %v510 = vpack.c.b16 %v426, %v425
    %v511 = vpack.c.b16 %v428, %v427
    %v512 = vpack.c.b16 %v430, %v429
    %v513 = vpack.c.b16 %v432, %v431
    %v514 = vpack.c.b16 %v434, %v433
    %v515 = vpack.c.b16 %v436, %v435
    %v516 = vpack.c.b16 %v438, %v437
    %v517 = vpack.c.b16 %v440, %v439
    %v518 = vpack.c.b16 %v442, %v441
    %v519 = vpack.c.b16 %v444, %v443
    %v520 = vpack.c.b16 %v446, %v445
    %v521 = vpack.c.b16 %v448, %v447
    %v522 = vpack.c.b16 %v450, %v449
    %v523 = vpack.c.b16 %v452, %v451
    %v524 = vpack.c.b16 %v454, %v453
    %v525 = vpack.c.b16 %v456, %v455
    %v526 = vpack.c.b16 %v458, %v457
    %v527 = vpack.c.b16 %v460, %v459
    %v528 = vpack.c.b16 %v462, %v461
    %v529 = vpack.c.b16 %v464, %v463
    %v530 = vpack.c.b16 %v466, %v465
    %595 = vmatpush.bf16.msra.mxu0 %v474
    %596 = vmatpush.bf16.msra.mxu0 %v473
    %597 = vmatpush.bf16.msra.mxu0 %v472
    %598 = vmatpush.bf16.msra.mxu0 %v471
    %599 = vmatpush.bf16.msra.mxu0 %v470
    %600 = vmatpush.bf16.msra.mxu0 %v469
    %601 = vmatpush.bf16.msra.mxu0 %v468
    %602 = vmatpush.bf16.msra.mxu0 %v467
    %603 = vmatmul.bf16.gmra.mxu0 %v195
    %v604 = vpop.f32.mrf.mxu0
    %v605 = vadd.f32 %v181, %v604
    %v606 = vpop.f32.mrf.mxu0
    %607 = vdwg.mxu0
    %608 = vmatpush.bf16.msra.mxu0 %v482
    %609 = vmatpush.bf16.msra.mxu0 %v481
    %610 = vmatpush.bf16.msra.mxu0 %v480
    %611 = vmatpush.bf16.msra.mxu0 %v479
    %612 = vmatpush.bf16.msra.mxu0 %v478
    %613 = vmatpush.bf16.msra.mxu0 %v477
    %614 = vmatpush.bf16.msra.mxu0 %v476
    %615 = vmatpush.bf16.msra.mxu0 %v475
    %616 = vmatmul.bf16.gmra.mxu0 %v196
    %v617 = vpop.f32.mrf.mxu0
    %v618 = vadd.f32 %v605, %v617
    %v619 = vpop.f32.mrf.mxu0
    %620 = vdwg.mxu0
    %621 = vmatpush.bf16.msra.mxu0 %v490
    %622 = vmatpush.bf16.msra.mxu0 %v489
    %623 = vmatpush.bf16.msra.mxu0 %v488
    %624 = vmatpush.bf16.msra.mxu0 %v487
    %625 = vmatpush.bf16.msra.mxu0 %v486
    %626 = vmatpush.bf16.msra.mxu0 %v485
    %627 = vmatpush.bf16.msra.mxu0 %v484
    %628 = vmatpush.bf16.msra.mxu0 %v483
    %629 = vmatmul.bf16.gmra.mxu0 %v197
    %v630 = vpop.f32.mrf.mxu0
    %v631 = vadd.f32 %v618, %v630
    %v632 = vpop.f32.mrf.mxu0
    %633 = vdwg.mxu0
    %634 = vmatpush.bf16.msra.mxu0 %v498
    %635 = vmatpush.bf16.msra.mxu0 %v497
    %636 = vmatpush.bf16.msra.mxu0 %v496
    %637 = vmatpush.bf16.msra.mxu0 %v495
    %638 = vmatpush.bf16.msra.mxu0 %v494
    %639 = vmatpush.bf16.msra.mxu0 %v493
    %640 = vmatpush.bf16.msra.mxu0 %v492
    %641 = vmatpush.bf16.msra.mxu0 %v491
    %642 = vmatmul.bf16.gmra.mxu0 %v198
    %v643 = vpop.f32.mrf.mxu0
    %v644 = vadd.f32 %v631, %v643
    %v645 = vpop.f32.mrf.mxu0
    %646 = vdwg.mxu0
    %647 = vmatpush.bf16.msra.mxu0 %v506
    %648 = vmatpush.bf16.msra.mxu0 %v505
    %649 = vmatpush.bf16.msra.mxu0 %v504
    %650 = vmatpush.bf16.msra.mxu0 %v503
    %651 = vmatpush.bf16.msra.mxu0 %v502
    %652 = vmatpush.bf16.msra.mxu0 %v501
    %653 = vmatpush.bf16.msra.mxu0 %v500
    %654 = vmatpush.bf16.msra.mxu0 %v499
    %655 = vmatmul.bf16.gmra.mxu0 %v199
    %v656 = vpop.f32.mrf.mxu0
    %v657 = vadd.f32 %v644, %v656
    %v658 = vpop.f32.mrf.mxu0
    %659 = vdwg.mxu0
    %660 = vmatpush.bf16.msra.mxu0 %v514
    %661 = vmatpush.bf16.msra.mxu0 %v513
    %662 = vmatpush.bf16.msra.mxu0 %v512
    %663 = vmatpush.bf16.msra.mxu0 %v511
    %664 = vmatpush.bf16.msra.mxu0 %v510
    %665 = vmatpush.bf16.msra.mxu0 %v509
    %666 = vmatpush.bf16.msra.mxu0 %v508
    %667 = vmatpush.bf16.msra.mxu0 %v507
    %668 = vmatmul.bf16.gmra.mxu0 %v200
    %v669 = vpop.f32.mrf.mxu0
    %v670 = vadd.f32 %v657, %v669
    %v671 = vpop.f32.mrf.mxu0
    %672 = vdwg.mxu0
    %673 = vmatpush.bf16.msra.mxu0 %v522
    %674 = vmatpush.bf16.msra.mxu0 %v521
    %675 = vmatpush.bf16.msra.mxu0 %v520
    %676 = vmatpush.bf16.msra.mxu0 %v519
    %677 = vmatpush.bf16.msra.mxu0 %v518
    %678 = vmatpush.bf16.msra.mxu0 %v517
    %679 = vmatpush.bf16.msra.mxu0 %v516
    %680 = vmatpush.bf16.msra.mxu0 %v515
    %681 = vmatmul.bf16.gmra.mxu0 %v201
    %v682 = vpop.f32.mrf.mxu0
    %v683 = vadd.f32 %v670, %v682
    %v684 = vpop.f32.mrf.mxu0
    %685 = vdwg.mxu0
    %686 = vmatpush.bf16.msra.mxu0 %v530
    %687 = vmatpush.bf16.msra.mxu0 %v529
    %688 = vmatpush.bf16.msra.mxu0 %v528
    %689 = vmatpush.bf16.msra.mxu0 %v527
    %690 = vmatpush.bf16.msra.mxu0 %v526
    %691 = vmatpush.bf16.msra.mxu0 %v525
    %692 = vmatpush.bf16.msra.mxu0 %v524
    %693 = vmatpush.bf16.msra.mxu0 %v523
    %694 = vmatmul.bf16.gmra.mxu0 %v202
    %v695 = vpop.f32.mrf.mxu0
    %v696 = vadd.f32 %v683, %v695
    %v697 = vpop.f32.mrf.mxu0
    %698 = vdwg.mxu0
    %v699 = vmax.f32 %v696, 0.0
    %v700 = vld [vmem:[%s7] sm:$0xff]
    %v701 = vld [vmem:[%s7 + $0x8] sm:$0xff]
    %v702 = vld [vmem:[%s7 + $0x10] sm:$0xff]
    %v703 = vld [vmem:[%s7 + $0x18] sm:$0xff]
    %v704 = vld [vmem:[%s8] sm:$0x1]
    %v706 = vperm.slane %v704, 0
    %vm708 = vcmask 261120
    %v710 = vsel %vm708, %v699, 0
    %712 = vmatpush.msra.mxu0 0.0
    %713 = vmatpush.msra.mxu0 0.0
    %714 = vmatpush.msra.mxu0 0.0
    %715 = vmatpush.msra.mxu0 0.0
    %716 = vmatpush.msra.mxu0 0.0
    %717 = vmatpush.msra.mxu0 0.0
    %718 = vmatpush.msra.mxu0 0.0
    %719 = vmatpush.msra.mxu0 0.0
    %720 = vmatpush.msra.mxu0 0.0
    %721 = vmatpush.msra.mxu0 0.0
    %722 = vmatpush.msra.mxu0 0.0
    %723 = vmatpush.msra.mxu0 0.0
    %724 = vmatpush.msra.mxu0 %v703
    %725 = vmatpush.msra.mxu0 %v702
    %726 = vmatpush.msra.mxu0 %v701
    %727 = vmatpush.msra.mxu0 %v700
    %728 = vmatmul.f32.gmra.mxu0 %v710
    %v729 = vpop.f32.mrf.mxu0
    %v730 = vadd.f32 %v706, %v729
    %731 = vdwg.mxu0
    %v732 = vmax.f32 %v730, 0.0
    %v733 = vld [vmem:[%s9] sm:$0xff]
    %v734 = vld [vmem:[%s9 + $0x8] sm:$0xff]
    %v735 = vld [vmem:[%s9 + $0x10] sm:$0xff]
    %v736 = vld [vmem:[%s9 + $0x18] sm:$0xff]
    %v737 = vld [vmem:[%s10] sm:$0x1]
    %v739 = vperm.slane %v737, 0
    %v742 = vsel %vm708, %v732, 0
    %744 = vmatpush.msra.mxu0 0.0
    %745 = vmatpush.msra.mxu0 0.0
    %746 = vmatpush.msra.mxu0 0.0
    %747 = vmatpush.msra.mxu0 0.0
    %748 = vmatpush.msra.mxu0 0.0
    %749 = vmatpush.msra.mxu0 0.0
    %750 = vmatpush.msra.mxu0 0.0
    %751 = vmatpush.msra.mxu0 0.0
    %752 = vmatpush.msra.mxu0 0.0
    %753 = vmatpush.msra.mxu0 0.0
    %754 = vmatpush.msra.mxu0 0.0
    %755 = vmatpush.msra.mxu0 0.0
    %756 = vmatpush.msra.mxu0 %v736
    %757 = vmatpush.msra.mxu0 %v735
    %758 = vmatpush.msra.mxu0 %v734
    %759 = vmatpush.msra.mxu0 %v733
    %760 = vmatmul.f32.gmra.mxu0 %v742
    %v761 = vpop.f32.mrf.mxu0
    %v762 = vadd.f32 %v739, %v761
    %763 = vdwg.mxu0
    %v764 = vmax.f32 %v762, 0.0
    %v765 = vld [vmem:[%s11] sm:$0xff]
    %v766 = vld [vmem:[%s11 + $0x8] sm:$0xff]
    %v767 = vld [vmem:[%s11 + $0x10] sm:$0xff]
    %v768 = vld [vmem:[%s11 + $0x18] sm:$0xff]
    %v769 = vld [vmem:[%s12] sm:$0x1]
    %v771 = vperm.slane %v769, 0
    %v774 = vsel %vm708, %v764, 0
    %776 = vmatpush.msra.mxu0 0.0
    %777 = vmatpush.msra.mxu0 0.0
    %778 = vmatpush.msra.mxu0 0.0
    %779 = vmatpush.msra.mxu0 0.0
    %780 = vmatpush.msra.mxu0 0.0
    %781 = vmatpush.msra.mxu0 0.0
    %782 = vmatpush.msra.mxu0 0.0
    %783 = vmatpush.msra.mxu0 0.0
    %784 = vmatpush.msra.mxu0 0.0
    %785 = vmatpush.msra.mxu0 0.0
    %786 = vmatpush.msra.mxu0 0.0
    %787 = vmatpush.msra.mxu0 0.0
    %788 = vmatpush.msra.mxu0 %v768
    %789 = vmatpush.msra.mxu0 %v767
    %790 = vmatpush.msra.mxu0 %v766
    %791 = vmatpush.msra.mxu0 %v765
    %792 = vmatmul.f32.gmra.mxu0 %v774
    %v793 = vpop.f32.mrf.mxu0
    %v794 = vadd.f32 %v771, %v793
    %795 = vdwg.mxu0
    %v796 = vld [vmem:[%s1] sm:$0xff]
    %v797 = vld [vmem:[%s3] sm:$0x3]
    %v798 = vunpack.c.0.s8 %v797
    %v799 = vld [vmem:[%s2] sm:$0x3]
    %v800 = vunpack.c.0.s8 %v799
    %v801 = vadd.s32 %v798, %v800
    %vm802 = vcmp.eq.s32.totalorder %v801, 0
    %vm803 = vcmp.eq.s32.totalorder %v801, 1
    %vm804 = vcmp.eq.s32.totalorder %v801, 2
    %806 = vset.pattern.permute.xlu0 3
    %807 = vperm.xlu0 %806, %v794
    %v808 = vpop.permute.xlu0 %807
    %v810 = vsel %vm804, %v808, 0.0
    %811 = vset.pattern.permute.xlu0 1
    %812 = vperm.xlu0 %811, %v794
    %v813 = vpop.permute.xlu0 %812
    %v815 = vsel %vm803, %v813, %v810
    %816 = vset.pattern.permute.xlu0 0
    %817 = vperm.xlu0 %816, %v794
    %v818 = vpop.permute.xlu0 %817
    %v820 = vsel %vm802, %v818, %v815
    %821 = vset.pattern.permute.xlu0 4
    %822 = vperm.xlu0 %821, %v794
    %v823 = vpop.permute.xlu0 %822
    %v825 = vsel %vm804, %v823, 0.0
    %826 = vset.pattern.permute.xlu0 2
    %827 = vperm.xlu0 %826, %v794
    %v828 = vpop.permute.xlu0 %827
    %v830 = vsel %vm803, %v828, %v825
    %v831 = vmul.f32 %v796, %v820
    %v832 = vadd.f32 %v831, %v830
    %833 = vmax.xlane.f32.xlu0 %v832
    %v834 = vpop.xlane.xlu0 %833
    %v835 = vsub.f32 %v832, %v834
    %v836 = vmul.f32 %v835, 1.442695
    %v837 = vpow.pop %v836
    %838 = vadd.xlane.f32.xlu0 %v837
    %v839 = vpop.xlane.xlu0 %838
    %v840 = vld [vmem:[%s4] sm:$0x3]
    %vm841 = vnez %v840
    %v842 = vsel %vm841, 16843009, 0
    %v843 = vunpack.c.0.s8 %v842
    %vm844 = vcmp.ne.s32.totalorder %v843, 0
    %v845 = vsel %vm844, %v832, -inf
    %846 = vmax.xlane.f32.xlu0 %v845
    %v847 = vpop.xlane.xlu0 %846
    %v848 = vsub.f32 %v832, %v847
    %v849 = vmul.f32 %v848, 1.442695
    %v850 = vpow.pop %v849
    %v851 = vsel %vm844, %v850, 0.0
    %852 = vadd.xlane.f32.xlu0 %v851
    %v853 = vpop.xlane.xlu0 %852
    %v854 = vlog2.pop %v853
    %v855 = vmul.f32 %v854, 0.6931472
    %v856 = vadd.f32 %v847, %v855
    %v857 = vlog2.pop %v839
    %v858 = vmul.f32 %v857, 0.6931472
    %v859 = vadd.f32 %v834, %v858
    %v860 = vsub.f32 %v856, %v859
    %v861 = vlaneseq
    %v862 = vand.u32 %v861, 127
    %vm863 = vcmp.eq.s32.totalorder %v862, 7
    %v864 = vsel %vm863, %v860, %v794
    %vm865 = vcmask 64512
    %866 = vst.msk [vmem:[#allocation2] sm:$0xff] %vm865, %v864
    // Predicated region
    $region54: #{tpu_custom_call.1} parent=1 // pred_check
      _
    $region55: #{tpu_custom_call.1} parent=1 // pred_check_branch
      %868 = sbr.rel (0) target = $region57
    $region56: #{tpu_custom_call.1} parent=1 // pred_region
      %870 = vsyncadd [#allocation3], 0
      %s872 = sshll.u32 [#allocation2], 4
      %s873 = int_to_ptr.vmem [resolvable:$true] %s872
      %s874 = sshll.u32 %s13, 4
      %s875 = int_to_ptr.hbm [resolvable:$true] %s874
      %877 = dma.vmem_to_hbm [thread:$0]  %s873, 128, %s875, [#allocation3]
    $region57: #{tpu_custom_call.1} parent=1 // pred_fallthru
      _
    // Predicated region
    $region58: #{tpu_custom_call.1} parent=1 // pred_check
      _
    $region59: #{tpu_custom_call.1} parent=1 // pred_check_branch
      %879 = sbr.rel (0) target = $region61
    $region60: #{tpu_custom_call.1} parent=1 // pred_region
      %881 = dma.done [#allocation3], 128
    $region61: #{tpu_custom_call.1} parent=1 // pred_fallthru
      _
    %882 = vsyncpa [#allocation3], 1

</llo_original>
